<compile_context>
chip_gen: v6e
topology: v6e:2x2x1
jax: 0.10.0
libtpu: 0.0.40
codegen_flags: <defaults>
</compile_context>

<pallas_src>
import functools

import jax
import jax.numpy as jnp
from jax.experimental import pallas as pl
from jax.experimental.pallas import tpu as pltpu

# Tile caps (lane/sublane aligned).  Worst-case double-buffered footprint with
# these caps is a few MiB -> comfortably inside the scoped-VMEM budget on every
# generation (v7x has only 64 MiB physical VMEM / 32 MiB scoped default).
_TM_CAP = 512
_TK_CAP = 1024
_TN_CAP = 512
_VMEM_LIMIT_BYTES = 32 * 1024 * 1024


def _round_up(x, m):
    return ((x + m - 1) // m) * m


def _pad_and_tile(dim, cap, align):
    """Pad `dim` only to hardware alignment.  Tile = padded dim if it fits the
    cap (single tile covers the whole dim); otherwise tile = cap and the dim is
    padded to a multiple of the cap (small relative overhead for large dims)."""
    d = _round_up(dim, align)
    if d <= cap:
        return d, d
    return cap, _round_up(d, cap)


def _maybe_split_for_two_cores(tm, m_full, tn, n_full, m_align):
    """v7x shards the 'parallel' grid axes over 2 TensorCores; make sure the
    (i, j) grid has >= 2 iterations whenever the problem allows it."""
    if (m_full // tm) * (n_full // tn) >= 2:
        return tm, tn
    # Prefer splitting N (keeps the whole batch in one M tile -> W streamed once).
    n_blocks = n_full // 128
    for nb in range(n_blocks // 2, 0, -1):
        if n_blocks % nb == 0 and n_blocks // nb >= 2:
            return tm, nb * 128
    # Fall back to splitting M.
    m_blocks = m_full // m_align
    for mb in range(m_blocks // 2, 0, -1):
        if m_blocks % mb == 0 and m_blocks // mb >= 2:
            return mb * m_align, tn
    return tm, tn  # tiny problem: a single tile is all there is


def _dot_precision(dtype):
    # f32 feed: request full-precision MXU passes.  bf16 feed is exact natively.
    return jax.lax.Precision.HIGHEST if dtype == jnp.float32 else None


def _linear_kernel_f32_out(x_ref, wt_ref, b_ref, o_ref):
    """f32 output: the output block is resident across the k (reduction) axis
    and doubles as the accumulator -> no VMEM scratch, no finalize copy.
    Bias is folded into the k == 0 init, so it is added exactly once."""

    @pl.when(pl.program_id(2) == 0)
    def _init():
        o_ref[...] = jnp.broadcast_to(b_ref[...], o_ref.shape)

    o_ref[...] += jnp.dot(
        x_ref[...], wt_ref[...],
        preferred_element_type=jnp.float32,
        precision=_dot_precision(x_ref.dtype),
    )


def _linear_kernel_acc(x_ref, wt_ref, b_ref, o_ref, acc_ref):
    """Non-f32 output: f32 VMEM scratch accumulator, finalize with bias + cast."""
    k = pl.program_id(2)

    @pl.when(k == 0)
    def _init():
        acc_ref[...] = jnp.zeros_like(acc_ref)

    acc_ref[...] += jnp.dot(
        x_ref[...], wt_ref[...],
        preferred_element_type=jnp.float32,
        precision=_dot_precision(x_ref.dtype),
    )

    @pl.when(k == pl.num_programs(2) - 1)
    def _finalize():
        o_ref[...] = (acc_ref[...] + b_ref[...]).astype(o_ref.dtype)


@functools.partial(jax.jit, static_argnames=("d_out", "mxu_dtype"))
def _linear_forward_padded(x, w_t_padded, bias_padded, *, d_out, mxu_dtype):
    """x: (B, D_in); w_t_padded: (K_full, N_full) pre-transposed/padded/cast;
    bias_padded: (1, N_full) f32.  Returns (B, d_out) in x's original dtype."""
    B, D_in = x.shape
    K_full, N_full = w_t_padded.shape
    out_dtype = x.dtype  # capture BEFORE the optional bf16 cast

    if mxu_dtype is not None:
        x = x.astype(mxu_dtype)
    feed_dtype = x.dtype
    # bf16 packs 2 rows per sublane -> align M to 16; f32 -> 8.
    m_align = 16 if jnp.dtype(feed_dtype).itemsize < 4 else 8

    tm, M_full = _pad_and_tile(B, _TM_CAP, m_align)
    # K/N padding (to 128 / to the cap) was fixed when the weights were prepared.
    tk = min(_TK_CAP, K_full)
    tn = min(_TN_CAP, N_full)
    tm, tn = _maybe_split_for_two_cores(tm, M_full, tn, N_full, m_align)

    # Only x is padded per call; zero K-padding contributes nothing to the sum.
    x_p = jnp.pad(x, ((0, M_full - B), (0, K_full - D_in)))

    grid = (M_full // tm, N_full // tn, K_full // tk)
    num_k_steps = grid[2]

    # Deeper prefetch on the K stream only when there are enough K steps for it
    # to matter (hides HBM latency when a single k-step's compute is short).
    stream_kwargs = {"pipeline_mode": pl.Buffered(3)} if num_k_steps >= 4 else {}

    x_spec = pl.BlockSpec((tm, tk), lambda i, j, k: (i, k), **stream_kwargs)
    # NOTE: with k innermost, consecutive grid steps re-DMA both the x and W
    # tiles.  W HBM traffic is minimized by covering the batch with a single M
    # tile (tm == M_full whenever it fits), not by the index_map ignoring i.
    w_spec = pl.BlockSpec((tk, tn), lambda i, j, k: (k, j), **stream_kwargs)
    b_spec = pl.BlockSpec((1, tn), lambda i, j, k: (0, j))
    o_spec = pl.BlockSpec((tm, tn), lambda i, j, k: (i, j))

    if out_dtype == jnp.float32:
        kernel = _linear_kernel_f32_out
        scratch = []
    else:
        kernel = _linear_kernel_acc
        scratch = [pltpu.VMEM((tm, tn), jnp.float32)]

    out_padded = pl.pallas_call(
        kernel,
        out_shape=jax.ShapeDtypeStruct((M_full, N_full), out_dtype),
        grid_spec=pltpu.PrefetchScalarGridSpec(
            num_scalar_prefetch=0,
            grid=grid,
            in_specs=[x_spec, w_spec, b_spec],
            out_specs=o_spec,
            scratch_shapes=scratch,
        ),
        compiler_params=pltpu.CompilerParams(
            dimension_semantics=("parallel", "parallel", "arbitrary"),
            vmem_limit_bytes=_VMEM_LIMIT_BYTES,
        ),
    )(x_p, w_t_padded, bias_padded)

    return out_padded[:B, :d_out]


class PallasLinear:
    """Pallas TPU equivalent of torch.nn.Linear: y = x @ W.T + b.

    The weight transpose, padding and optional bf16 cast happen ONCE here, so
    repeated forward calls do not pay an extra HBM pass over W per call.
    """

    def __init__(self, weight, bias, *, mxu_dtype=jnp.bfloat16):
        d_out, d_in = weight.shape
        self.d_in = int(d_in)
        self.d_out = int(d_out)
        self.mxu_dtype = mxu_dtype

        feed = weight.dtype if mxu_dtype is None else mxu_dtype
        _, k_full = _pad_and_tile(self.d_in, _TK_CAP, 128)
        _, n_full = _pad_and_tile(self.d_out, _TN_CAP, 128)

        self.w_t_padded = jnp.pad(
            weight.T.astype(feed),
            ((0, k_full - self.d_in), (0, n_full - self.d_out)),
        )
        self.bias_padded = jnp.pad(
            bias.astype(jnp.float32), (0, n_full - self.d_out)
        ).reshape(1, n_full)

    def __call__(self, x):
        return _linear_forward_padded(
            x, self.w_t_padded, self.bias_padded,
            d_out=self.d_out, mxu_dtype=self.mxu_dtype,
        )


if __name__ == "__main__":
    key = jax.random.PRNGKey(0)
    kx, kw, kb, kx2, kw2, kb2 = jax.random.split(key, 6)

    # 1) Module defaults: nn.Linear(1, 1), batch 8 -- exact f32 MXU feed.
    batch, d_in, d_out = 8, 1, 1
    x = jax.random.normal(kx, (batch, d_in), jnp.float32)
    bound = 1.0 / (d_in ** 0.5)
    w = jax.random.uniform(kw, (d_out, d_in), jnp.float32, -bound, bound)
    b = jax.random.uniform(kb, (d_out,), jnp.float32, -bound, bound)

    layer = PallasLinear(w, b, mxu_dtype=None)  # exact f32 path
    y = jax.block_until_ready(layer(x))
    y_ref = x @ w.T + b[None, :]
    assert y.shape == (batch, d_out)
    assert jnp.allclose(y, y_ref, atol=1e-5, rtol=1e-5)

    # 2) Larger shape: exercises single-M-tile weight streaming, the N split
    #    (>= 2 parallel output tiles for v7x's two TensorCores) and the default
    #    bf16 MXU feed with f32 accumulation.
    B2, D_in2, D_out2 = 384, 640, 384
    x2 = jax.random.normal(kx2, (B2, D_in2), jnp.float32)
    bound2 = 1.0 / (D_in2 ** 0.5)
    w2 = jax.random.uniform(kw2, (D_out2, D_in2), jnp.float32, -bound2, bound2)
    b2 = jax.random.uniform(kb2, (D_out2,), jnp.float32, -bound2, bound2)

    layer2 = PallasLinear(w2, b2, mxu_dtype=jnp.bfloat16)  # weights prepped once
    y2 = jax.block_until_ready(layer2(x2))
    y2_ref = x2 @ w2.T + b2[None, :]
    assert y2.shape == (B2, D_out2)
    assert jnp.allclose(y2, y2_ref, atol=5e-2, rtol=5e-2)

    # 3) bf16 activations in -> bf16 out: exercises the scratch-accumulator
    #    kernel variant (output dtype != f32).
    x3 = x2.astype(jnp.bfloat16)
    y3 = jax.block_until_ready(layer2(x3))
    assert y3.dtype == jnp.bfloat16
    assert jnp.allclose(y3.astype(jnp.float32), y2_ref, atol=1e-1, rtol=1e-1)

    print("KERNEL_OK")
</pallas_src>

<mosaic_0001>
module attributes {stable_mosaic.version = 11 : i64} {
  func.func @_linear_kernel_f32_out(%arg0: i32, %arg1: i32, %arg2: i32, %arg3: memref<8x128xf32, #tpu.memory_space<vmem>>, %arg4: memref<128x128xf32, #tpu.memory_space<vmem>>, %arg5: memref<1x128xf32, #tpu.memory_space<vmem>>, %arg6: memref<8x128xf32, #tpu.memory_space<vmem>>) attributes {dimension_semantics = [#tpu.dimension_semantics<parallel>, #tpu.dimension_semantics<parallel>, #tpu.dimension_semantics<arbitrary>], iteration_bounds = array<i64: 1, 1, 1>, scalar_prefetch = 0 : i64, scratch_operands = 0 : i64, tpu.core_type = #tpu.core_type<tc>, window_params = [{transform_indices = @transform_0, window_bounds = array<i64: 8, 128>}, {transform_indices = @transform_1, window_bounds = array<i64: 128, 128>}, {transform_indices = @transform_2, window_bounds = array<i64: 1, 128>}, {transform_indices = @transform_3, window_bounds = array<i64: 8, 128>}]} {
    %c0_i32 = arith.constant 0 : i32
    %0 = arith.cmpi eq, %arg2, %c0_i32 : i32
    %1 = arith.extui %0 : i1 to i32
    %c0_i32_0 = arith.constant 0 : i32
    %2 = arith.cmpi ne, %1, %c0_i32_0 : i32
    scf.if %2 {
      %c0_8 = arith.constant 0 : index
      %c0_9 = arith.constant 0 : index
      %9 = vector.load %arg5[%c0_8, %c0_9] : memref<1x128xf32, #tpu.memory_space<vmem>>, vector<1x128xf32>
      %10 = vector.shape_cast %9 : vector<1x128xf32> to vector<1x128xf32>
      %11 = vector.broadcast %10 : vector<1x128xf32> to vector<8x128xf32>
      %c0_10 = arith.constant 0 : index
      %c0_11 = arith.constant 0 : index
      %12 = vector.load %arg6[%c0_10, %c0_11] : memref<8x128xf32, #tpu.memory_space<vmem>>, vector<8x128xf32>
      tpu.vector_store %arg6[%c0_10, %c0_11], %11 {strides = array<i32>} : memref<8x128xf32, #tpu.memory_space<vmem>>, vector<8x128xf32>,
    } else {
    }
    %c0 = arith.constant 0 : index
    %c0_1 = arith.constant 0 : index
    %3 = vector.load %arg6[%c0, %c0_1] : memref<8x128xf32, #tpu.memory_space<vmem>>, vector<8x128xf32>
    %c0_2 = arith.constant 0 : index
    %c0_3 = arith.constant 0 : index
    %4 = vector.load %arg3[%c0_2, %c0_3] : memref<8x128xf32, #tpu.memory_space<vmem>>, vector<8x128xf32>
    %c0_4 = arith.constant 0 : index
    %c0_5 = arith.constant 0 : index
    %5 = vector.load %arg4[%c0_4, %c0_5] : memref<128x128xf32, #tpu.memory_space<vmem>>, vector<128x128xf32>
    %cst = arith.constant dense<0.000000e+00> : vector<8x128xf32>
    %6 = tpu.matmul %4, %5, %cst {dimension_numbers = #tpu.dot_dimension_numbers<[1], [0], [0], [1], [0, 0, 1, 1], [], []>, precision = #tpu.contract_precision<fp32>} : vector<8x128xf32>, vector<128x128xf32>, vector<8x128xf32> -> vector<8x128xf32>
    %7 = arith.addf %3, %6 : vector<8x128xf32>
    %c0_6 = arith.constant 0 : index
    %c0_7 = arith.constant 0 : index
    %8 = vector.load %arg6[%c0_6, %c0_7] : memref<8x128xf32, #tpu.memory_space<vmem>>, vector<8x128xf32>
    tpu.vector_store %arg6[%c0_6, %c0_7], %7 {strides = array<i32>} : memref<8x128xf32, #tpu.memory_space<vmem>>, vector<8x128xf32>,
    return
  }
  func.func @transform_0(%arg0: i32, %arg1: i32, %arg2: i32) -> (i32, i32) {
    %c0_i32 = arith.constant 0 : i32
    return %arg0, %arg2 : i32, i32
  }
  func.func @transform_1(%arg0: i32, %arg1: i32, %arg2: i32) -> (i32, i32) {
    %c0_i32 = arith.constant 0 : i32
    return %arg2, %arg1 : i32, i32
  }
  func.func @transform_2(%arg0: i32, %arg1: i32, %arg2: i32) -> (i32, i32) {
    %c0_i32 = arith.constant 0 : i32
    %c0_i32_0 = arith.constant 0 : i32
    return %c0_i32, %arg1 : i32, i32
  }
  func.func @transform_3(%arg0: i32, %arg1: i32, %arg2: i32) -> (i32, i32) {
    %c0_i32 = arith.constant 0 : i32
    return %arg0, %arg1 : i32, i32
  }
}

</mosaic_0001>

<llo_original>
// kernel: _linear_forward_padded.1
$region0: #{_linear_forward_padded.1}
  #allocation0 [shape = 'u32[]', space=smem, size = 0x4, offset = 0x4, fixed_abs, tag = 'smem constant byte address 0x4 - core index']
  #allocation1 [shape = 'u32[144,128]{1,0:T(1,128)}', space=vmem, size = 0x12000, scoped, tag = 'internal scratch']
  %s0 = inlined_call_operand.vmem [shape: f32[8,128], index: 0, kind: input, shape index: {}]
  %s1 = inlined_call_operand.hbm [shape: f32[128,128], index: 1, kind: input, shape index: {}]
  %s2 = inlined_call_operand.vmem [shape: f32[1,128], index: 2, kind: input, shape index: {}]
  %s3 = inlined_call_operand.vmem [shape: f32[8,128], index: 3, kind: output, shape index: {}]
  %s4 = sld [smem:[#allocation0]]
  $region30: #{_linear_forward_padded.1} parent=0
    _
  %s6 = ssub.s32 1, %s4
  %s7 = scalar_select 0, %s6, %s4
  $region1: #{_linear_forward_padded.1} parent=0
    #allocation2 [shape = 'u8[65536]{0}', space=vmem, size = 0x10000, scoped, tag = 'input window, operand 1, single buffered']
    #allocation3 [shape = 's32[1]{0}', space=sflag, size = 0x4, scoped, tag = 'scoped memory for _linear_forward_padded.1']
    %8 = vsyncpa [#allocation3], 0
    // Predicated region
    $region2: #{_linear_forward_padded.1} parent=1 // pred_check
      _
    $region3: #{_linear_forward_padded.1} parent=1 // pred_check_branch
      %10 = sbr.rel (0) target = $region5
    $region4: #{_linear_forward_padded.1} parent=1 // pred_region
      _
    $region5: #{_linear_forward_padded.1} parent=1 // pred_fallthru
      _
    // Predicated region
    $region6: #{_linear_forward_padded.1} parent=1 // pred_check
      _
    $region7: #{_linear_forward_padded.1} parent=1 // pred_check_branch
      %12 = sbr.rel (0) target = $region9
    $region8: #{_linear_forward_padded.1} parent=1 // pred_region
      %s14 = ssub.s32 2048, 2048
      %15 = vsyncadd [#allocation3], %s14
      %s16 = sshll.u32 [#allocation2], 4
      %s17 = int_to_ptr.vmem [resolvable:$true] %s16
      %22 = dma.hbm_to_vmem [thread:$0]  %s1, 2048, %s17, [#allocation3], 128, 128, 8
    $region9: #{_linear_forward_padded.1} parent=1 // pred_fallthru
      _
    // Predicated region
    $region10: #{_linear_forward_padded.1} parent=1 // pred_check
      _
    $region11: #{_linear_forward_padded.1} parent=1 // pred_check_branch
      %24 = sbr.rel (0) target = $region13
    $region12: #{_linear_forward_padded.1} parent=1 // pred_region
      _
    $region13: #{_linear_forward_padded.1} parent=1 // pred_fallthru
      _
    // Predicated region
    $region14: #{_linear_forward_padded.1} parent=1 // pred_check
      _
    $region15: #{_linear_forward_padded.1} parent=1 // pred_check_branch
      %26 = sbr.rel (0) target = $region17
    $region16: #{_linear_forward_padded.1} parent=1 // pred_region
      %27 = dma.done [#allocation3], 2048
    $region17: #{_linear_forward_padded.1} parent=1 // pred_fallthru
      _
    %p28 = scmp.eq.s32.totalorder 0, 0
    // Predicated region
    $region18: #{_linear_forward_padded.1} parent=1 // pred_check
      %p29 = pneg %p28
    $region19: #{_linear_forward_padded.1} parent=1 // pred_check_branch
      %31 = sbr.rel (%p29) target = $region21
    $region20: #{_linear_forward_padded.1} parent=1 // pred_region
      %v32 = vld [vmem:[%s2] sm:$0x1]
      %v34 = vlaneseq
      %v35 = vshrl.u32 %v34, 7
      %v36 = vsub.s32 0, %v35
      %v37 = vrot.slane %v32, %v36
      %39 = vst [vmem:[%s3] sm:$0xff] %v37
    $region21: #{_linear_forward_padded.1} parent=1 // pred_fallthru
      _
    %v40 = vld [vmem:[%s3] sm:$0xff]
    %v41 = vld [vmem:[%s0] sm:$0xff]
    %v42 = vld [vmem:[#allocation2] sm:$0xff]
    %v43 = vld [vmem:[#allocation2 + $0x8] sm:$0xff]
    %v44 = vld [vmem:[#allocation2 + $0x10] sm:$0xff]
    %v45 = vld [vmem:[#allocation2 + $0x18] sm:$0xff]
    %v46 = vld [vmem:[#allocation2 + $0x20] sm:$0xff]
    %v47 = vld [vmem:[#allocation2 + $0x28] sm:$0xff]
    %v48 = vld [vmem:[#allocation2 + $0x30] sm:$0xff]
    %v49 = vld [vmem:[#allocation2 + $0x38] sm:$0xff]
    %v50 = vld [vmem:[#allocation2 + $0x40] sm:$0xff]
    %v51 = vld [vmem:[#allocation2 + $0x48] sm:$0xff]
    %v52 = vld [vmem:[#allocation2 + $0x50] sm:$0xff]
    %v53 = vld [vmem:[#allocation2 + $0x58] sm:$0xff]
    %v54 = vld [vmem:[#allocation2 + $0x60] sm:$0xff]
    %v55 = vld [vmem:[#allocation2 + $0x68] sm:$0xff]
    %v56 = vld [vmem:[#allocation2 + $0x70] sm:$0xff]
    %v57 = vld [vmem:[#allocation2 + $0x78] sm:$0xff]
    %58 = vmatprep.subr.mxu0 0.0
    %v59 = vand.u32 %v57, 4294901760
    %60 = vmatpush1.msra.mxu0 %v59
    %61 = vmatprep.subr.mxu0 0.0
    %v62 = vand.u32 %v56, 4294901760
    %63 = vmatpush1.msra.mxu0 %v62
    %64 = vmatprep.subr.mxu0 0.0
    %v65 = vand.u32 %v55, 4294901760
    %66 = vmatpush1.msra.mxu0 %v65
    %67 = vmatprep.subr.mxu0 0.0
    %v68 = vand.u32 %v54, 4294901760
    %69 = vmatpush1.msra.mxu0 %v68
    %70 = vmatprep.subr.mxu0 0.0
    %v71 = vand.u32 %v53, 4294901760
    %72 = vmatpush1.msra.mxu0 %v71
    %73 = vmatprep.subr.mxu0 0.0
    %v74 = vand.u32 %v52, 4294901760
    %75 = vmatpush1.msra.mxu0 %v74
    %76 = vmatprep.subr.mxu0 0.0
    %v77 = vand.u32 %v51, 4294901760
    %78 = vmatpush1.msra.mxu0 %v77
    %79 = vmatprep.subr.mxu0 0.0
    %v80 = vand.u32 %v50, 4294901760
    %81 = vmatpush1.msra.mxu0 %v80
    %82 = vmatprep.subr.mxu0 0.0
    %v83 = vand.u32 %v49, 4294901760
    %84 = vmatpush1.msra.mxu0 %v83
    %85 = vmatprep.subr.mxu0 0.0
    %v86 = vand.u32 %v48, 4294901760
    %87 = vmatpush1.msra.mxu0 %v86
    %88 = vmatprep.subr.mxu0 0.0
    %v89 = vand.u32 %v47, 4294901760
    %90 = vmatpush1.msra.mxu0 %v89
    %91 = vmatprep.subr.mxu0 0.0
    %v92 = vand.u32 %v46, 4294901760
    %93 = vmatpush1.msra.mxu0 %v92
    %94 = vmatprep.subr.mxu0 0.0
    %v95 = vand.u32 %v45, 4294901760
    %96 = vmatpush1.msra.mxu0 %v95
    %97 = vmatprep.subr.mxu0 0.0
    %v98 = vand.u32 %v44, 4294901760
    %99 = vmatpush1.msra.mxu0 %v98
    %100 = vmatprep.subr.mxu0 0.0
    %v101 = vand.u32 %v43, 4294901760
    %102 = vmatpush1.msra.mxu0 %v101
    %103 = vmatprep.subr.mxu0 0.0
    %v104 = vand.u32 %v42, 4294901760
    %105 = vmatpush1.msra.mxu0 %v104
    %106 = vmatprep.subr.mxu0 0.0
    %107 = vmatpush2.msra.mxu0 0.0
    %108 = vmatprep.subr.mxu0 0.0
    %109 = vmatpush2.msra.mxu0 0.0
    %110 = vmatprep.subr.mxu0 0.0
    %111 = vmatpush2.msra.mxu0 0.0
    %112 = vmatprep.subr.mxu0 0.0
    %113 = vmatpush2.msra.mxu0 0.0
    %114 = vmatprep.subr.mxu0 0.0
    %115 = vmatpush2.msra.mxu0 0.0
    %116 = vmatprep.subr.mxu0 0.0
    %117 = vmatpush2.msra.mxu0 0.0
    %118 = vmatprep.subr.mxu0 0.0
    %119 = vmatpush2.msra.mxu0 0.0
    %120 = vmatprep.subr.mxu0 0.0
    %121 = vmatpush2.msra.mxu0 0.0
    %122 = vmatprep.subr.mxu0 0.0
    %123 = vmatpush2.msra.mxu0 0.0
    %124 = vmatprep.subr.mxu0 0.0
    %125 = vmatpush2.msra.mxu0 0.0
    %126 = vmatprep.subr.mxu0 0.0
    %127 = vmatpush2.msra.mxu0 0.0
    %128 = vmatprep.subr.mxu0 0.0
    %129 = vmatpush2.msra.mxu0 0.0
    %130 = vmatprep.subr.mxu0 0.0
    %131 = vmatpush2.msra.mxu0 0.0
    %132 = vmatprep.subr.mxu0 0.0
    %133 = vmatpush2.msra.mxu0 0.0
    %134 = vmatprep.subr.mxu0 0.0
    %135 = vmatpush2.msra.mxu0 0.0
    %136 = vmatprep.subr.mxu0 0.0
    %137 = vmatpush2.msra.mxu0 0.0
    %138 = vmatprep.mubr.f32.mxu0 0.0
    %v139 = vand.u32 %v41, 4294901760
    %v140 = vsub.f32 %v41, %v139
    %v141 = vand.u32 %v140, 4294901760
    %v142 = vsub.f32 %v140, %v141
    %v143 = vand.u32 %v142, 4294901760
    %144 = vmatmul.mubr.f32.gmra.mxu0 %v143
    %v145 = vpop.f32.mrf.mxu0
    %v146 = vadd.f32 0.0, %v145
    %v147 = vpop.f32.mrf.mxu0
    %148 = vdwg.mxu0
    %149 = vmatprep.subr.mxu0 0.0
    %v150 = vand.u32 %v57, 4294901760
    %v151 = vsub.f32 %v57, %v150
    %v152 = vand.u32 %v151, 4294901760
    %v153 = vsub.f32 %v151, %v152
    %v154 = vand.u32 %v153, 4294901760
    %155 = vmatpush1.msra.mxu0 %v154
    %156 = vmatprep.subr.mxu0 0.0
    %v157 = vand.u32 %v56, 4294901760
    %v158 = vsub.f32 %v56, %v157
    %v159 = vand.u32 %v158, 4294901760
    %v160 = vsub.f32 %v158, %v159
    %v161 = vand.u32 %v160, 4294901760
    %162 = vmatpush1.msra.mxu0 %v161
    %163 = vmatprep.subr.mxu0 0.0
    %v164 = vand.u32 %v55, 4294901760
    %v165 = vsub.f32 %v55, %v164
    %v166 = vand.u32 %v165, 4294901760
    %v167 = vsub.f32 %v165, %v166
    %v168 = vand.u32 %v167, 4294901760
    %169 = vmatpush1.msra.mxu0 %v168
    %170 = vmatprep.subr.mxu0 0.0
    %v171 = vand.u32 %v54, 4294901760
    %v172 = vsub.f32 %v54, %v171
    %v173 = vand.u32 %v172, 4294901760
    %v174 = vsub.f32 %v172, %v173
    %v175 = vand.u32 %v174, 4294901760
    %176 = vmatpush1.msra.mxu0 %v175
    %177 = vmatprep.subr.mxu0 0.0
    %v178 = vand.u32 %v53, 4294901760
    %v179 = vsub.f32 %v53, %v178
    %v180 = vand.u32 %v179, 4294901760
    %v181 = vsub.f32 %v179, %v180
    %v182 = vand.u32 %v181, 4294901760
    %183 = vmatpush1.msra.mxu0 %v182
    %184 = vmatprep.subr.mxu0 0.0
    %v185 = vand.u32 %v52, 4294901760
    %v186 = vsub.f32 %v52, %v185
    %v187 = vand.u32 %v186, 4294901760
    %v188 = vsub.f32 %v186, %v187
    %v189 = vand.u32 %v188, 4294901760
    %190 = vmatpush1.msra.mxu0 %v189
    %191 = vmatprep.subr.mxu0 0.0
    %v192 = vand.u32 %v51, 4294901760
    %v193 = vsub.f32 %v51, %v192
    %v194 = vand.u32 %v193, 4294901760
    %v195 = vsub.f32 %v193, %v194
    %v196 = vand.u32 %v195, 4294901760
    %197 = vmatpush1.msra.mxu0 %v196
    %198 = vmatprep.subr.mxu0 0.0
    %v199 = vand.u32 %v50, 4294901760
    %v200 = vsub.f32 %v50, %v199
    %v201 = vand.u32 %v200, 4294901760
    %v202 = vsub.f32 %v200, %v201
    %v203 = vand.u32 %v202, 4294901760
    %204 = vmatpush1.msra.mxu0 %v203
    %205 = vmatprep.subr.mxu0 0.0
    %v206 = vand.u32 %v49, 4294901760
    %v207 = vsub.f32 %v49, %v206
    %v208 = vand.u32 %v207, 4294901760
    %v209 = vsub.f32 %v207, %v208
    %v210 = vand.u32 %v209, 4294901760
    %211 = vmatpush1.msra.mxu0 %v210
    %212 = vmatprep.subr.mxu0 0.0
    %v213 = vand.u32 %v48, 4294901760
    %v214 = vsub.f32 %v48, %v213
    %v215 = vand.u32 %v214, 4294901760
    %v216 = vsub.f32 %v214, %v215
    %v217 = vand.u32 %v216, 4294901760
    %218 = vmatpush1.msra.mxu0 %v217
    %219 = vmatprep.subr.mxu0 0.0
    %v220 = vand.u32 %v47, 4294901760
    %v221 = vsub.f32 %v47, %v220
    %v222 = vand.u32 %v221, 4294901760
    %v223 = vsub.f32 %v221, %v222
    %v224 = vand.u32 %v223, 4294901760
    %225 = vmatpush1.msra.mxu0 %v224
    %226 = vmatprep.subr.mxu0 0.0
    %v227 = vand.u32 %v46, 4294901760
    %v228 = vsub.f32 %v46, %v227
    %v229 = vand.u32 %v228, 4294901760
    %v230 = vsub.f32 %v228, %v229
    %v231 = vand.u32 %v230, 4294901760
    %232 = vmatpush1.msra.mxu0 %v231
    %233 = vmatprep.subr.mxu0 0.0
    %v234 = vand.u32 %v45, 4294901760
    %v235 = vsub.f32 %v45, %v234
    %v236 = vand.u32 %v235, 4294901760
    %v237 = vsub.f32 %v235, %v236
    %v238 = vand.u32 %v237, 4294901760
    %239 = vmatpush1.msra.mxu0 %v238
    %240 = vmatprep.subr.mxu0 0.0
    %v241 = vand.u32 %v44, 4294901760
    %v242 = vsub.f32 %v44, %v241
    %v243 = vand.u32 %v242, 4294901760
    %v244 = vsub.f32 %v242, %v243
    %v245 = vand.u32 %v244, 4294901760
    %246 = vmatpush1.msra.mxu0 %v245
    %247 = vmatprep.subr.mxu0 0.0
    %v248 = vand.u32 %v43, 4294901760
    %v249 = vsub.f32 %v43, %v248
    %v250 = vand.u32 %v249, 4294901760
    %v251 = vsub.f32 %v249, %v250
    %v252 = vand.u32 %v251, 4294901760
    %253 = vmatpush1.msra.mxu0 %v252
    %254 = vmatprep.subr.mxu0 0.0
    %v255 = vand.u32 %v42, 4294901760
    %v256 = vsub.f32 %v42, %v255
    %v257 = vand.u32 %v256, 4294901760
    %v258 = vsub.f32 %v256, %v257
    %v259 = vand.u32 %v258, 4294901760
    %260 = vmatpush1.msra.mxu0 %v259
    %261 = vmatprep.subr.mxu0 0.0
    %262 = vmatpush2.msra.mxu0 0.0
    %263 = vmatprep.subr.mxu0 0.0
    %264 = vmatpush2.msra.mxu0 0.0
    %265 = vmatprep.subr.mxu0 0.0
    %266 = vmatpush2.msra.mxu0 0.0
    %267 = vmatprep.subr.mxu0 0.0
    %268 = vmatpush2.msra.mxu0 0.0
    %269 = vmatprep.subr.mxu0 0.0
    %270 = vmatpush2.msra.mxu0 0.0
    %271 = vmatprep.subr.mxu0 0.0
    %272 = vmatpush2.msra.mxu0 0.0
    %273 = vmatprep.subr.mxu0 0.0
    %274 = vmatpush2.msra.mxu0 0.0
    %275 = vmatprep.subr.mxu0 0.0
    %276 = vmatpush2.msra.mxu0 0.0
    %277 = vmatprep.subr.mxu0 0.0
    %278 = vmatpush2.msra.mxu0 0.0
    %279 = vmatprep.subr.mxu0 0.0
    %280 = vmatpush2.msra.mxu0 0.0
    %281 = vmatprep.subr.mxu0 0.0
    %282 = vmatpush2.msra.mxu0 0.0
    %283 = vmatprep.subr.mxu0 0.0
    %284 = vmatpush2.msra.mxu0 0.0
    %285 = vmatprep.subr.mxu0 0.0
    %286 = vmatpush2.msra.mxu0 0.0
    %287 = vmatprep.subr.mxu0 0.0
    %288 = vmatpush2.msra.mxu0 0.0
    %289 = vmatprep.subr.mxu0 0.0
    %290 = vmatpush2.msra.mxu0 0.0
    %291 = vmatprep.subr.mxu0 0.0
    %292 = vmatpush2.msra.mxu0 0.0
    %293 = vmatprep.mubr.f32.mxu0 0.0
    %v294 = vand.u32 %v41, 4294901760
    %295 = vmatmul.mubr.f32.gmra.mxu0 %v294
    %v296 = vpop.f32.mrf.mxu0
    %v297 = vadd.f32 %v146, %v296
    %v298 = vpop.f32.mrf.mxu0
    %299 = vdwg.mxu0
    %300 = vmatprep.subr.mxu0 0.0
    %v301 = vand.u32 %v57, 4294901760
    %v302 = vsub.f32 %v57, %v301
    %303 = vmatpush1.msra.mxu0 %v302
    %304 = vmatprep.subr.mxu0 0.0
    %v305 = vand.u32 %v56, 4294901760
    %v306 = vsub.f32 %v56, %v305
    %307 = vmatpush1.msra.mxu0 %v306
    %308 = vmatprep.subr.mxu0 0.0
    %v309 = vand.u32 %v55, 4294901760
    %v310 = vsub.f32 %v55, %v309
    %311 = vmatpush1.msra.mxu0 %v310
    %312 = vmatprep.subr.mxu0 0.0
    %v313 = vand.u32 %v54, 4294901760
    %v314 = vsub.f32 %v54, %v313
    %315 = vmatpush1.msra.mxu0 %v314
    %316 = vmatprep.subr.mxu0 0.0
    %v317 = vand.u32 %v53, 4294901760
    %v318 = vsub.f32 %v53, %v317
    %319 = vmatpush1.msra.mxu0 %v318
    %320 = vmatprep.subr.mxu0 0.0
    %v321 = vand.u32 %v52, 4294901760
    %v322 = vsub.f32 %v52, %v321
    %323 = vmatpush1.msra.mxu0 %v322
    %324 = vmatprep.subr.mxu0 0.0
    %v325 = vand.u32 %v51, 4294901760
    %v326 = vsub.f32 %v51, %v325
    %327 = vmatpush1.msra.mxu0 %v326
    %328 = vmatprep.subr.mxu0 0.0
    %v329 = vand.u32 %v50, 4294901760
    %v330 = vsub.f32 %v50, %v329
    %331 = vmatpush1.msra.mxu0 %v330
    %332 = vmatprep.subr.mxu0 0.0
    %v333 = vand.u32 %v49, 4294901760
    %v334 = vsub.f32 %v49, %v333
    %335 = vmatpush1.msra.mxu0 %v334
    %336 = vmatprep.subr.mxu0 0.0
    %v337 = vand.u32 %v48, 4294901760
    %v338 = vsub.f32 %v48, %v337
    %339 = vmatpush1.msra.mxu0 %v338
    %340 = vmatprep.subr.mxu0 0.0
    %v341 = vand.u32 %v47, 4294901760
    %v342 = vsub.f32 %v47, %v341
    %343 = vmatpush1.msra.mxu0 %v342
    %344 = vmatprep.subr.mxu0 0.0
    %v345 = vand.u32 %v46, 4294901760
    %v346 = vsub.f32 %v46, %v345
    %347 = vmatpush1.msra.mxu0 %v346
    %348 = vmatprep.subr.mxu0 0.0
    %v349 = vand.u32 %v45, 4294901760
    %v350 = vsub.f32 %v45, %v349
    %351 = vmatpush1.msra.mxu0 %v350
    %352 = vmatprep.subr.mxu0 0.0
    %v353 = vand.u32 %v44, 4294901760
    %v354 = vsub.f32 %v44, %v353
    %355 = vmatpush1.msra.mxu0 %v354
    %356 = vmatprep.subr.mxu0 0.0
    %v357 = vand.u32 %v43, 4294901760
    %v358 = vsub.f32 %v43, %v357
    %359 = vmatpush1.msra.mxu0 %v358
    %360 = vmatprep.subr.mxu0 0.0
    %v361 = vand.u32 %v42, 4294901760
    %v362 = vsub.f32 %v42, %v361
    %363 = vmatpush1.msra.mxu0 %v362
    %364 = vmatprep.subr.mxu0 0.0
    %365 = vmatpush2.msra.mxu0 0.0
    %366 = vmatprep.subr.mxu0 0.0
    %367 = vmatpush2.msra.mxu0 0.0
    %368 = vmatprep.subr.mxu0 0.0
    %369 = vmatpush2.msra.mxu0 0.0
    %370 = vmatprep.subr.mxu0 0.0
    %371 = vmatpush2.msra.mxu0 0.0
    %372 = vmatprep.subr.mxu0 0.0
    %373 = vmatpush2.msra.mxu0 0.0
    %374 = vmatprep.subr.mxu0 0.0
    %375 = vmatpush2.msra.mxu0 0.0
    %376 = vmatprep.subr.mxu0 0.0
    %377 = vmatpush2.msra.mxu0 0.0
    %378 = vmatprep.subr.mxu0 0.0
    %379 = vmatpush2.msra.mxu0 0.0
    %380 = vmatprep.subr.mxu0 0.0
    %381 = vmatpush2.msra.mxu0 0.0
    %382 = vmatprep.subr.mxu0 0.0
    %383 = vmatpush2.msra.mxu0 0.0
    %384 = vmatprep.subr.mxu0 0.0
    %385 = vmatpush2.msra.mxu0 0.0
    %386 = vmatprep.subr.mxu0 0.0
    %387 = vmatpush2.msra.mxu0 0.0
    %388 = vmatprep.subr.mxu0 0.0
    %389 = vmatpush2.msra.mxu0 0.0
    %390 = vmatprep.subr.mxu0 0.0
    %391 = vmatpush2.msra.mxu0 0.0
    %392 = vmatprep.subr.mxu0 0.0
    %393 = vmatpush2.msra.mxu0 0.0
    %394 = vmatprep.subr.mxu0 0.0
    %395 = vmatpush2.msra.mxu0 0.0
    %396 = vmatprep.mubr.f32.mxu0 0.0
    %v397 = vand.u32 %v41, 4294901760
    %v398 = vsub.f32 %v41, %v397
    %399 = vmatmul.mubr.f32.gmra.mxu0 %v398
    %v400 = vpop.f32.mrf.mxu0
    %v401 = vadd.f32 %v297, %v400
    %v402 = vpop.f32.mrf.mxu0
    %403 = vdwg.mxu0
    %404 = vmatprep.subr.mxu0 0.0
    %v405 = vand.u32 %v57, 4294901760
    %406 = vmatpush1.msra.mxu0 %v405
    %407 = vmatprep.subr.mxu0 0.0
    %v408 = vand.u32 %v56, 4294901760
    %409 = vmatpush1.msra.mxu0 %v408
    %410 = vmatprep.subr.mxu0 0.0
    %v411 = vand.u32 %v55, 4294901760
    %412 = vmatpush1.msra.mxu0 %v411
    %413 = vmatprep.subr.mxu0 0.0
    %v414 = vand.u32 %v54, 4294901760
    %415 = vmatpush1.msra.mxu0 %v414
    %416 = vmatprep.subr.mxu0 0.0
    %v417 = vand.u32 %v53, 4294901760
    %418 = vmatpush1.msra.mxu0 %v417
    %419 = vmatprep.subr.mxu0 0.0
    %v420 = vand.u32 %v52, 4294901760
    %421 = vmatpush1.msra.mxu0 %v420
    %422 = vmatprep.subr.mxu0 0.0
    %v423 = vand.u32 %v51, 4294901760
    %424 = vmatpush1.msra.mxu0 %v423
    %425 = vmatprep.subr.mxu0 0.0
    %v426 = vand.u32 %v50, 4294901760
    %427 = vmatpush1.msra.mxu0 %v426
    %428 = vmatprep.subr.mxu0 0.0
    %v429 = vand.u32 %v49, 4294901760
    %430 = vmatpush1.msra.mxu0 %v429
    %431 = vmatprep.subr.mxu0 0.0
    %v432 = vand.u32 %v48, 4294901760
    %433 = vmatpush1.msra.mxu0 %v432
    %434 = vmatprep.subr.mxu0 0.0
    %v435 = vand.u32 %v47, 4294901760
    %436 = vmatpush1.msra.mxu0 %v435
    %437 = vmatprep.subr.mxu0 0.0
    %v438 = vand.u32 %v46, 4294901760
    %439 = vmatpush1.msra.mxu0 %v438
    %440 = vmatprep.subr.mxu0 0.0
    %v441 = vand.u32 %v45, 4294901760
    %442 = vmatpush1.msra.mxu0 %v441
    %443 = vmatprep.subr.mxu0 0.0
    %v444 = vand.u32 %v44, 4294901760
    %445 = vmatpush1.msra.mxu0 %v444
    %446 = vmatprep.subr.mxu0 0.0
    %v447 = vand.u32 %v43, 4294901760
    %448 = vmatpush1.msra.mxu0 %v447
    %449 = vmatprep.subr.mxu0 0.0
    %v450 = vand.u32 %v42, 4294901760
    %451 = vmatpush1.msra.mxu0 %v450
    %452 = vmatprep.subr.mxu0 0.0
    %453 = vmatpush2.msra.mxu0 0.0
    %454 = vmatprep.subr.mxu0 0.0
    %455 = vmatpush2.msra.mxu0 0.0
    %456 = vmatprep.subr.mxu0 0.0
    %457 = vmatpush2.msra.mxu0 0.0
    %458 = vmatprep.subr.mxu0 0.0
    %459 = vmatpush2.msra.mxu0 0.0
    %460 = vmatprep.subr.mxu0 0.0
    %461 = vmatpush2.msra.mxu0 0.0
    %462 = vmatprep.subr.mxu0 0.0
    %463 = vmatpush2.msra.mxu0 0.0
    %464 = vmatprep.subr.mxu0 0.0
    %465 = vmatpush2.msra.mxu0 0.0
    %466 = vmatprep.subr.mxu0 0.0
    %467 = vmatpush2.msra.mxu0 0.0
    %468 = vmatprep.subr.mxu0 0.0
    %469 = vmatpush2.msra.mxu0 0.0
    %470 = vmatprep.subr.mxu0 0.0
    %471 = vmatpush2.msra.mxu0 0.0
    %472 = vmatprep.subr.mxu0 0.0
    %473 = vmatpush2.msra.mxu0 0.0
    %474 = vmatprep.subr.mxu0 0.0
    %475 = vmatpush2.msra.mxu0 0.0
    %476 = vmatprep.subr.mxu0 0.0
    %477 = vmatpush2.msra.mxu0 0.0
    %478 = vmatprep.subr.mxu0 0.0
    %479 = vmatpush2.msra.mxu0 0.0
    %480 = vmatprep.subr.mxu0 0.0
    %481 = vmatpush2.msra.mxu0 0.0
    %482 = vmatprep.subr.mxu0 0.0
    %483 = vmatpush2.msra.mxu0 0.0
    %484 = vmatprep.mubr.f32.mxu0 0.0
    %v485 = vand.u32 %v41, 4294901760
    %v486 = vsub.f32 %v41, %v485
    %v487 = vand.u32 %v486, 4294901760
    %488 = vmatmul.mubr.f32.gmra.mxu0 %v487
    %v489 = vpop.f32.mrf.mxu0
    %v490 = vadd.f32 %v401, %v489
    %v491 = vpop.f32.mrf.mxu0
    %492 = vdwg.mxu0
    %493 = vmatprep.subr.mxu0 0.0
    %v494 = vand.u32 %v57, 4294901760
    %v495 = vsub.f32 %v57, %v494
    %v496 = vand.u32 %v495, 4294901760
    %497 = vmatpush1.msra.mxu0 %v496
    %498 = vmatprep.subr.mxu0 0.0
    %v499 = vand.u32 %v56, 4294901760
    %v500 = vsub.f32 %v56, %v499
    %v501 = vand.u32 %v500, 4294901760
    %502 = vmatpush1.msra.mxu0 %v501
    %503 = vmatprep.subr.mxu0 0.0
    %v504 = vand.u32 %v55, 4294901760
    %v505 = vsub.f32 %v55, %v504
    %v506 = vand.u32 %v505, 4294901760
    %507 = vmatpush1.msra.mxu0 %v506
    %508 = vmatprep.subr.mxu0 0.0
    %v509 = vand.u32 %v54, 4294901760
    %v510 = vsub.f32 %v54, %v509
    %v511 = vand.u32 %v510, 4294901760
    %512 = vmatpush1.msra.mxu0 %v511
    %513 = vmatprep.subr.mxu0 0.0
    %v514 = vand.u32 %v53, 4294901760
    %v515 = vsub.f32 %v53, %v514
    %v516 = vand.u32 %v515, 4294901760
    %517 = vmatpush1.msra.mxu0 %v516
    %518 = vmatprep.subr.mxu0 0.0
    %v519 = vand.u32 %v52, 4294901760
    %v520 = vsub.f32 %v52, %v519
    %v521 = vand.u32 %v520, 4294901760
    %522 = vmatpush1.msra.mxu0 %v521
    %523 = vmatprep.subr.mxu0 0.0
    %v524 = vand.u32 %v51, 4294901760
    %v525 = vsub.f32 %v51, %v524
    %v526 = vand.u32 %v525, 4294901760
    %527 = vmatpush1.msra.mxu0 %v526
    %528 = vmatprep.subr.mxu0 0.0
    %v529 = vand.u32 %v50, 4294901760
    %v530 = vsub.f32 %v50, %v529
    %v531 = vand.u32 %v530, 4294901760
    %532 = vmatpush1.msra.mxu0 %v531
    %533 = vmatprep.subr.mxu0 0.0
    %v534 = vand.u32 %v49, 4294901760
    %v535 = vsub.f32 %v49, %v534
    %v536 = vand.u32 %v535, 4294901760
    %537 = vmatpush1.msra.mxu0 %v536
    %538 = vmatprep.subr.mxu0 0.0
    %v539 = vand.u32 %v48, 4294901760
    %v540 = vsub.f32 %v48, %v539
    %v541 = vand.u32 %v540, 4294901760
    %542 = vmatpush1.msra.mxu0 %v541
    %543 = vmatprep.subr.mxu0 0.0
    %v544 = vand.u32 %v47, 4294901760
    %v545 = vsub.f32 %v47, %v544
    %v546 = vand.u32 %v545, 4294901760
    %547 = vmatpush1.msra.mxu0 %v546
    %548 = vmatprep.subr.mxu0 0.0
    %v549 = vand.u32 %v46, 4294901760
    %v550 = vsub.f32 %v46, %v549
    %v551 = vand.u32 %v550, 4294901760
    %552 = vmatpush1.msra.mxu0 %v551
    %553 = vmatprep.subr.mxu0 0.0
    %v554 = vand.u32 %v45, 4294901760
    %v555 = vsub.f32 %v45, %v554
    %v556 = vand.u32 %v555, 4294901760
    %557 = vmatpush1.msra.mxu0 %v556
    %558 = vmatprep.subr.mxu0 0.0
    %v559 = vand.u32 %v44, 4294901760
    %v560 = vsub.f32 %v44, %v559
    %v561 = vand.u32 %v560, 4294901760
    %562 = vmatpush1.msra.mxu0 %v561
    %563 = vmatprep.subr.mxu0 0.0
    %v564 = vand.u32 %v43, 4294901760
    %v565 = vsub.f32 %v43, %v564
    %v566 = vand.u32 %v565, 4294901760
    %567 = vmatpush1.msra.mxu0 %v566
    %568 = vmatprep.subr.mxu0 0.0
    %v569 = vand.u32 %v42, 4294901760
    %v570 = vsub.f32 %v42, %v569
    %v571 = vand.u32 %v570, 4294901760
    %572 = vmatpush1.msra.mxu0 %v571
    %573 = vmatprep.subr.mxu0 0.0
    %574 = vmatpush2.msra.mxu0 0.0
    %575 = vmatprep.subr.mxu0 0.0
    %576 = vmatpush2.msra.mxu0 0.0
    %577 = vmatprep.subr.mxu0 0.0
    %578 = vmatpush2.msra.mxu0 0.0
    %579 = vmatprep.subr.mxu0 0.0
    %580 = vmatpush2.msra.mxu0 0.0
    %581 = vmatprep.subr.mxu0 0.0
    %582 = vmatpush2.msra.mxu0 0.0
    %583 = vmatprep.subr.mxu0 0.0
    %584 = vmatpush2.msra.mxu0 0.0
    %585 = vmatprep.subr.mxu0 0.0
    %586 = vmatpush2.msra.mxu0 0.0
    %587 = vmatprep.subr.mxu0 0.0
    %588 = vmatpush2.msra.mxu0 0.0
    %589 = vmatprep.subr.mxu0 0.0
    %590 = vmatpush2.msra.mxu0 0.0
    %591 = vmatprep.subr.mxu0 0.0
    %592 = vmatpush2.msra.mxu0 0.0
    %593 = vmatprep.subr.mxu0 0.0
    %594 = vmatpush2.msra.mxu0 0.0
    %595 = vmatprep.subr.mxu0 0.0
    %596 = vmatpush2.msra.mxu0 0.0
    %597 = vmatprep.subr.mxu0 0.0
    %598 = vmatpush2.msra.mxu0 0.0
    %599 = vmatprep.subr.mxu0 0.0
    %600 = vmatpush2.msra.mxu0 0.0
    %601 = vmatprep.subr.mxu0 0.0
    %602 = vmatpush2.msra.mxu0 0.0
    %603 = vmatprep.subr.mxu0 0.0
    %604 = vmatpush2.msra.mxu0 0.0
    %605 = vmatprep.mubr.f32.mxu0 0.0
    %v606 = vand.u32 %v41, 4294901760
    %607 = vmatmul.mubr.f32.gmra.mxu0 %v606
    %v608 = vpop.f32.mrf.mxu0
    %v609 = vadd.f32 %v490, %v608
    %v610 = vpop.f32.mrf.mxu0
    %611 = vdwg.mxu0
    %612 = vmatprep.subr.mxu0 0.0
    %v613 = vand.u32 %v57, 4294901760
    %614 = vmatpush1.msra.mxu0 %v613
    %615 = vmatprep.subr.mxu0 0.0
    %v616 = vand.u32 %v56, 4294901760
    %617 = vmatpush1.msra.mxu0 %v616
    %618 = vmatprep.subr.mxu0 0.0
    %v619 = vand.u32 %v55, 4294901760
    %620 = vmatpush1.msra.mxu0 %v619
    %621 = vmatprep.subr.mxu0 0.0
    %v622 = vand.u32 %v54, 4294901760
    %623 = vmatpush1.msra.mxu0 %v622
    %624 = vmatprep.subr.mxu0 0.0
    %v625 = vand.u32 %v53, 4294901760
    %626 = vmatpush1.msra.mxu0 %v625
    %627 = vmatprep.subr.mxu0 0.0
    %v628 = vand.u32 %v52, 4294901760
    %629 = vmatpush1.msra.mxu0 %v628
    %630 = vmatprep.subr.mxu0 0.0
    %v631 = vand.u32 %v51, 4294901760
    %632 = vmatpush1.msra.mxu0 %v631
    %633 = vmatprep.subr.mxu0 0.0
    %v634 = vand.u32 %v50, 4294901760
    %635 = vmatpush1.msra.mxu0 %v634
    %636 = vmatprep.subr.mxu0 0.0
    %v637 = vand.u32 %v49, 4294901760
    %638 = vmatpush1.msra.mxu0 %v637
    %639 = vmatprep.subr.mxu0 0.0
    %v640 = vand.u32 %v48, 4294901760
    %641 = vmatpush1.msra.mxu0 %v640
    %642 = vmatprep.subr.mxu0 0.0
    %v643 = vand.u32 %v47, 4294901760
    %644 = vmatpush1.msra.mxu0 %v643
    %645 = vmatprep.subr.mxu0 0.0
    %v646 = vand.u32 %v46, 4294901760
    %647 = vmatpush1.msra.mxu0 %v646
    %648 = vmatprep.subr.mxu0 0.0
    %v649 = vand.u32 %v45, 4294901760
    %650 = vmatpush1.msra.mxu0 %v649
    %651 = vmatprep.subr.mxu0 0.0
    %v652 = vand.u32 %v44, 4294901760
    %653 = vmatpush1.msra.mxu0 %v652
    %654 = vmatprep.subr.mxu0 0.0
    %v655 = vand.u32 %v43, 4294901760
    %656 = vmatpush1.msra.mxu0 %v655
    %657 = vmatprep.subr.mxu0 0.0
    %v658 = vand.u32 %v42, 4294901760
    %659 = vmatpush1.msra.mxu0 %v658
    %660 = vmatprep.subr.mxu0 0.0
    %661 = vmatpush2.msra.mxu0 0.0
    %662 = vmatprep.subr.mxu0 0.0
    %663 = vmatpush2.msra.mxu0 0.0
    %664 = vmatprep.subr.mxu0 0.0
    %665 = vmatpush2.msra.mxu0 0.0
    %666 = vmatprep.subr.mxu0 0.0
    %667 = vmatpush2.msra.mxu0 0.0
    %668 = vmatprep.subr.mxu0 0.0
    %669 = vmatpush2.msra.mxu0 0.0
    %670 = vmatprep.subr.mxu0 0.0
    %671 = vmatpush2.msra.mxu0 0.0
    %672 = vmatprep.subr.mxu0 0.0
    %673 = vmatpush2.msra.mxu0 0.0
    %674 = vmatprep.subr.mxu0 0.0
    %675 = vmatpush2.msra.mxu0 0.0
    %676 = vmatprep.subr.mxu0 0.0
    %677 = vmatpush2.msra.mxu0 0.0
    %678 = vmatprep.subr.mxu0 0.0
    %679 = vmatpush2.msra.mxu0 0.0
    %680 = vmatprep.subr.mxu0 0.0
    %681 = vmatpush2.msra.mxu0 0.0
    %682 = vmatprep.subr.mxu0 0.0
    %683 = vmatpush2.msra.mxu0 0.0
    %684 = vmatprep.subr.mxu0 0.0
    %685 = vmatpush2.msra.mxu0 0.0
    %686 = vmatprep.subr.mxu0 0.0
    %687 = vmatpush2.msra.mxu0 0.0
    %688 = vmatprep.subr.mxu0 0.0
    %689 = vmatpush2.msra.mxu0 0.0
    %690 = vmatprep.subr.mxu0 0.0
    %691 = vmatpush2.msra.mxu0 0.0
    %692 = vmatprep.mubr.f32.mxu0 0.0
    %v693 = vand.u32 %v41, 4294901760
    %694 = vmatmul.mubr.f32.gmra.mxu0 %v693
    %v695 = vpop.f32.mrf.mxu0
    %v696 = vadd.f32 %v609, %v695
    %v697 = vpop.f32.mrf.mxu0
    %698 = vdwg.mxu0
    %v699 = vadd.f32 %v40, %v696
    %700 = vst [vmem:[%s3] sm:$0xff] %v699
    // Predicated region
    $region22: #{_linear_forward_padded.1} parent=1 // pred_check
      _
    $region23: #{_linear_forward_padded.1} parent=1 // pred_check_branch
      %702 = sbr.rel (0) target = $region25
    $region24: #{_linear_forward_padded.1} parent=1 // pred_region
      _
    $region25: #{_linear_forward_padded.1} parent=1 // pred_fallthru
      _
    // Predicated region
    $region26: #{_linear_forward_padded.1} parent=1 // pred_check
      _
    $region27: #{_linear_forward_padded.1} parent=1 // pred_check_branch
      %704 = sbr.rel (0) target = $region29
    $region28: #{_linear_forward_padded.1} parent=1 // pred_region
      _
    $region29: #{_linear_forward_padded.1} parent=1 // pred_fallthru
      _
    %705 = vsyncpa [#allocation3], 1

</llo_original>
